<compile_context>
chip_gen: v6e
topology: v6e:2x2x1
jax: 0.10.0
libtpu: 0.0.40
codegen_flags: <defaults>
</compile_context>

<pallas_src>
import jax
import jax.numpy as jnp
from jax.experimental import pallas as pl
from jax.experimental.pallas import tpu as pltpu

INPUT_DIM = 2
HIDDEN_DIM = 10
OUTPUT_DIM = 1

LANES = 128      # lane width of a vreg
SUBLANES = 8     # sublane count of a vreg


def _round_up(n, m):
    return ((n + m - 1) // m) * m


def mlp_kernel(x_ref, w1_ref, b1_ref, w2_ref, b2_ref, o_ref):
    # x_ref:  (INPUT_DIM, TR, 128) VMEM tile, batch flattened over (row=sublane, lane)
    # w1_ref: (INPUT_DIM*HIDDEN_DIM,) SMEM (row-major (in, hidden))
    # b1_ref: (HIDDEN_DIM,) SMEM
    # w2_ref: (HIDDEN_DIM,) SMEM
    # b2_ref: (OUTPUT_DIM,) SMEM
    # o_ref:  (TR, 128) VMEM tile
    x0 = x_ref[0]                          # (TR, 128)
    x1 = x_ref[1]                          # (TR, 128)
    acc = jnp.zeros_like(x0) + b2_ref[0]   # fold output bias into the accumulator
    # Unrolled VPU broadcast-FMA chain; the K=2 / K=10 contractions are far too
    # small for the MXU, so keep everything on the vector ALUs.
    for j in range(HIDDEN_DIM):
        h = w1_ref[j] * x0 + w1_ref[HIDDEN_DIM + j] * x1 + b1_ref[j]
        h = jnp.maximum(h, 0.0)            # ReLU
        acc = acc + w2_ref[j] * h
    o_ref[...] = acc


def regression_model_forward(x, w1, b1, w2, b2, *, rows_per_tile=1024):
    """x: (B, INPUT_DIM) float -> (B, OUTPUT_DIM) float32.

    rows_per_tile: number of 128-wide batch rows per grid step
    (1024 rows -> 131072 batch elements, ~1.5 MiB of HBM traffic per step).
    """
    B = x.shape[0]

    nrows_needed = -(-B // LANES)                               # ceil(B / 128)
    tr = max(SUBLANES, min(rows_per_tile, _round_up(nrows_needed, SUBLANES)))
    tr = _round_up(tr, SUBLANES)                                # sublane-aligned tile
    nrows = _round_up(nrows_needed, tr)                         # grid-divisible
    b_pad = nrows * LANES
    grid = (nrows // tr,)

    # Layout plumbing (wrapper side): batch onto (row, lane), zero-pad the tail.
    x_pad = jnp.pad(x.astype(jnp.float32), ((0, b_pad - B), (0, 0)))   # (B_pad, 2)
    x_3d = x_pad.T.reshape(INPUT_DIM, nrows, LANES)

    # Flatten the tiny parameters to 1-D so their SMEM footprint stays minimal
    # (2-D SMEM arrays pad to [ceil(R/8)*8, ceil(C/128)*128] words).
    w1_f = w1.astype(jnp.float32).reshape(INPUT_DIM * HIDDEN_DIM)       # (20,)
    b1_f = b1.astype(jnp.float32).reshape(HIDDEN_DIM)                   # (10,)
    w2_f = w2.astype(jnp.float32).reshape(HIDDEN_DIM)                   # (10,)
    b2_f = b2.astype(jnp.float32).reshape(OUTPUT_DIM)                   # (1,)

    smem = pl.BlockSpec(memory_space=pltpu.MemorySpace.SMEM)

    out = pl.pallas_call(
        mlp_kernel,
        out_shape=jax.ShapeDtypeStruct((nrows, LANES), jnp.float32),
        grid_spec=pltpu.PrefetchScalarGridSpec(
            num_scalar_prefetch=0,
            grid=grid,
            in_specs=[
                pl.BlockSpec((INPUT_DIM, tr, LANES), lambda i: (0, i, 0)),
                smem,  # w1 (flattened)
                smem,  # b1
                smem,  # w2
                smem,  # b2
            ],
            out_specs=pl.BlockSpec((tr, LANES), lambda i: (i, 0)),
        ),
        compiler_params=pltpu.CompilerParams(
            dimension_semantics=("parallel",),
        ),
    )(x_3d, w1_f, b1_f, w2_f, b2_f)

    return out.reshape(-1)[:B].reshape(B, OUTPUT_DIM)


def init_params(key):
    """Deterministic init mimicking nn.Linear default (uniform +-1/sqrt(fan_in)).
    Weights stored already-transposed as (in_features, out_features)."""
    k1, k2, k3, k4 = jax.random.split(key, 4)
    bound1 = 1.0 / jnp.sqrt(INPUT_DIM)
    bound2 = 1.0 / jnp.sqrt(HIDDEN_DIM)
    w1 = jax.random.uniform(k1, (INPUT_DIM, HIDDEN_DIM), jnp.float32, -bound1, bound1)
    b1 = jax.random.uniform(k2, (HIDDEN_DIM,), jnp.float32, -bound1, bound1)
    w2 = jax.random.uniform(k3, (HIDDEN_DIM, OUTPUT_DIM), jnp.float32, -bound2, bound2)
    b2 = jax.random.uniform(k4, (OUTPUT_DIM,), jnp.float32, -bound2, bound2)
    return w1, b1, w2, b2


def _reference(x, w1, b1, w2, b2):
    return jnp.maximum(x @ w1 + b1, 0.0) @ w2 + b2


if __name__ == "__main__":
    key = jax.random.PRNGKey(0)
    kx, kp, kx2 = jax.random.split(key, 3)
    w1, b1, w2, b2 = init_params(kp)

    # Small case (single tile, padded batch).
    batch = 8
    x = jax.random.normal(kx, (batch, INPUT_DIM), jnp.float32)
    out = jax.block_until_ready(regression_model_forward(x, w1, b1, w2, b2))
    ref = _reference(x, w1, b1, w2, b2)
    assert out.shape == (batch, OUTPUT_DIM)
    assert jnp.allclose(out, ref, atol=1e-5, rtol=1e-5)

    # Larger ragged case exercising a multi-step grid + tail masking.
    batch2 = 2500
    x2 = jax.random.normal(kx2, (batch2, INPUT_DIM), jnp.float32)
    out2 = jax.block_until_ready(
        regression_model_forward(x2, w1, b1, w2, b2, rows_per_tile=8)
    )
    ref2 = _reference(x2, w1, b1, w2, b2)
    assert out2.shape == (batch2, OUTPUT_DIM)
    assert jnp.allclose(out2, ref2, atol=1e-5, rtol=1e-5)

    print("KERNEL_OK")
</pallas_src>

<mosaic_0001>
module attributes {stable_mosaic.version = 11 : i64} {
  func.func @mlp_kernel(%arg0: i32, %arg1: memref<2x8x128xf32, #tpu.memory_space<vmem>>, %arg2: memref<20xf32, #tpu.memory_space<smem>>, %arg3: memref<10xf32, #tpu.memory_space<smem>>, %arg4: memref<10xf32, #tpu.memory_space<smem>>, %arg5: memref<1xf32, #tpu.memory_space<smem>>, %arg6: memref<8x128xf32, #tpu.memory_space<vmem>>) attributes {dimension_semantics = [#tpu.dimension_semantics<parallel>], iteration_bounds = array<i64: 1>, scalar_prefetch = 0 : i64, scratch_operands = 0 : i64, tpu.core_type = #tpu.core_type<tc>, window_params = [{transform_indices = @transform_0, window_bounds = array<i64: 2, 8, 128>}, {transform_indices = @transform_1, window_bounds = array<i64: 20>}, {transform_indices = @transform_2, window_bounds = array<i64: 10>}, {transform_indices = @transform_3, window_bounds = array<i64: 10>}, {transform_indices = @transform_4, window_bounds = array<i64: 1>}, {transform_indices = @transform_5, window_bounds = array<i64: 8, 128>}]} {
    %c0 = arith.constant 0 : index
    %c0_0 = arith.constant 0 : index
    %c0_1 = arith.constant 0 : index
    %0 = vector.load %arg1[%c0, %c0_0, %c0_1] : memref<2x8x128xf32, #tpu.memory_space<vmem>>, vector<1x8x128xf32>
    %1 = vector.shape_cast %0 : vector<1x8x128xf32> to vector<8x128xf32>
    %c1 = arith.constant 1 : index
    %c0_2 = arith.constant 0 : index
    %c0_3 = arith.constant 0 : index
    %2 = vector.load %arg1[%c1, %c0_2, %c0_3] : memref<2x8x128xf32, #tpu.memory_space<vmem>>, vector<1x8x128xf32>
    %3 = vector.shape_cast %2 : vector<1x8x128xf32> to vector<8x128xf32>
    %cst = arith.constant 0.000000e+00 : f32
    %4 = vector.broadcast %cst : f32 to vector<8x128xf32>
    %c0_4 = arith.constant 0 : index
    %5 = memref.load %arg5[%c0_4] : memref<1xf32, #tpu.memory_space<smem>>
    %6 = vector.broadcast %5 : f32 to vector<8x128xf32>
    %7 = arith.addf %4, %6 : vector<8x128xf32>
    %c0_5 = arith.constant 0 : index
    %8 = memref.load %arg2[%c0_5] : memref<20xf32, #tpu.memory_space<smem>>
    %9 = vector.broadcast %8 : f32 to vector<8x128xf32>
    %10 = arith.mulf %9, %1 : vector<8x128xf32>
    %c10 = arith.constant 10 : index
    %11 = memref.load %arg2[%c10] : memref<20xf32, #tpu.memory_space<smem>>
    %12 = vector.broadcast %11 : f32 to vector<8x128xf32>
    %13 = arith.mulf %12, %3 : vector<8x128xf32>
    %14 = arith.addf %10, %13 : vector<8x128xf32>
    %c0_6 = arith.constant 0 : index
    %15 = memref.load %arg3[%c0_6] : memref<10xf32, #tpu.memory_space<smem>>
    %16 = vector.broadcast %15 : f32 to vector<8x128xf32>
    %17 = arith.addf %14, %16 : vector<8x128xf32>
    %cst_7 = arith.constant 0.000000e+00 : f32
    %18 = vector.broadcast %cst_7 : f32 to vector<8x128xf32>
    %19 = arith.maximumf %17, %18 : vector<8x128xf32>
    %c0_8 = arith.constant 0 : index
    %20 = memref.load %arg4[%c0_8] : memref<10xf32, #tpu.memory_space<smem>>
    %21 = vector.broadcast %20 : f32 to vector<8x128xf32>
    %22 = arith.mulf %21, %19 : vector<8x128xf32>
    %23 = arith.addf %7, %22 : vector<8x128xf32>
    %c1_9 = arith.constant 1 : index
    %24 = memref.load %arg2[%c1_9] : memref<20xf32, #tpu.memory_space<smem>>
    %25 = vector.broadcast %24 : f32 to vector<8x128xf32>
    %26 = arith.mulf %25, %1 : vector<8x128xf32>
    %c11 = arith.constant 11 : index
    %27 = memref.load %arg2[%c11] : memref<20xf32, #tpu.memory_space<smem>>
    %28 = vector.broadcast %27 : f32 to vector<8x128xf32>
    %29 = arith.mulf %28, %3 : vector<8x128xf32>
    %30 = arith.addf %26, %29 : vector<8x128xf32>
    %c1_10 = arith.constant 1 : index
    %31 = memref.load %arg3[%c1_10] : memref<10xf32, #tpu.memory_space<smem>>
    %32 = vector.broadcast %31 : f32 to vector<8x128xf32>
    %33 = arith.addf %30, %32 : vector<8x128xf32>
    %cst_11 = arith.constant 0.000000e+00 : f32
    %34 = vector.broadcast %cst_11 : f32 to vector<8x128xf32>
    %35 = arith.maximumf %33, %34 : vector<8x128xf32>
    %c1_12 = arith.constant 1 : index
    %36 = memref.load %arg4[%c1_12] : memref<10xf32, #tpu.memory_space<smem>>
    %37 = vector.broadcast %36 : f32 to vector<8x128xf32>
    %38 = arith.mulf %37, %35 : vector<8x128xf32>
    %39 = arith.addf %23, %38 : vector<8x128xf32>
    %c2 = arith.constant 2 : index
    %40 = memref.load %arg2[%c2] : memref<20xf32, #tpu.memory_space<smem>>
    %41 = vector.broadcast %40 : f32 to vector<8x128xf32>
    %42 = arith.mulf %41, %1 : vector<8x128xf32>
    %c12 = arith.constant 12 : index
    %43 = memref.load %arg2[%c12] : memref<20xf32, #tpu.memory_space<smem>>
    %44 = vector.broadcast %43 : f32 to vector<8x128xf32>
    %45 = arith.mulf %44, %3 : vector<8x128xf32>
    %46 = arith.addf %42, %45 : vector<8x128xf32>
    %c2_13 = arith.constant 2 : index
    %47 = memref.load %arg3[%c2_13] : memref<10xf32, #tpu.memory_space<smem>>
    %48 = vector.broadcast %47 : f32 to vector<8x128xf32>
    %49 = arith.addf %46, %48 : vector<8x128xf32>
    %cst_14 = arith.constant 0.000000e+00 : f32
    %50 = vector.broadcast %cst_14 : f32 to vector<8x128xf32>
    %51 = arith.maximumf %49, %50 : vector<8x128xf32>
    %c2_15 = arith.constant 2 : index
    %52 = memref.load %arg4[%c2_15] : memref<10xf32, #tpu.memory_space<smem>>
    %53 = vector.broadcast %52 : f32 to vector<8x128xf32>
    %54 = arith.mulf %53, %51 : vector<8x128xf32>
    %55 = arith.addf %39, %54 : vector<8x128xf32>
    %c3 = arith.constant 3 : index
    %56 = memref.load %arg2[%c3] : memref<20xf32, #tpu.memory_space<smem>>
    %57 = vector.broadcast %56 : f32 to vector<8x128xf32>
    %58 = arith.mulf %57, %1 : vector<8x128xf32>
    %c13 = arith.constant 13 : index
    %59 = memref.load %arg2[%c13] : memref<20xf32, #tpu.memory_space<smem>>
    %60 = vector.broadcast %59 : f32 to vector<8x128xf32>
    %61 = arith.mulf %60, %3 : vector<8x128xf32>
    %62 = arith.addf %58, %61 : vector<8x128xf32>
    %c3_16 = arith.constant 3 : index
    %63 = memref.load %arg3[%c3_16] : memref<10xf32, #tpu.memory_space<smem>>
    %64 = vector.broadcast %63 : f32 to vector<8x128xf32>
    %65 = arith.addf %62, %64 : vector<8x128xf32>
    %cst_17 = arith.constant 0.000000e+00 : f32
    %66 = vector.broadcast %cst_17 : f32 to vector<8x128xf32>
    %67 = arith.maximumf %65, %66 : vector<8x128xf32>
    %c3_18 = arith.constant 3 : index
    %68 = memref.load %arg4[%c3_18] : memref<10xf32, #tpu.memory_space<smem>>
    %69 = vector.broadcast %68 : f32 to vector<8x128xf32>
    %70 = arith.mulf %69, %67 : vector<8x128xf32>
    %71 = arith.addf %55, %70 : vector<8x128xf32>
    %c4 = arith.constant 4 : index
    %72 = memref.load %arg2[%c4] : memref<20xf32, #tpu.memory_space<smem>>
    %73 = vector.broadcast %72 : f32 to vector<8x128xf32>
    %74 = arith.mulf %73, %1 : vector<8x128xf32>
    %c14 = arith.constant 14 : index
    %75 = memref.load %arg2[%c14] : memref<20xf32, #tpu.memory_space<smem>>
    %76 = vector.broadcast %75 : f32 to vector<8x128xf32>
    %77 = arith.mulf %76, %3 : vector<8x128xf32>
    %78 = arith.addf %74, %77 : vector<8x128xf32>
    %c4_19 = arith.constant 4 : index
    %79 = memref.load %arg3[%c4_19] : memref<10xf32, #tpu.memory_space<smem>>
    %80 = vector.broadcast %79 : f32 to vector<8x128xf32>
    %81 = arith.addf %78, %80 : vector<8x128xf32>
    %cst_20 = arith.constant 0.000000e+00 : f32
    %82 = vector.broadcast %cst_20 : f32 to vector<8x128xf32>
    %83 = arith.maximumf %81, %82 : vector<8x128xf32>
    %c4_21 = arith.constant 4 : index
    %84 = memref.load %arg4[%c4_21] : memref<10xf32, #tpu.memory_space<smem>>
    %85 = vector.broadcast %84 : f32 to vector<8x128xf32>
    %86 = arith.mulf %85, %83 : vector<8x128xf32>
    %87 = arith.addf %71, %86 : vector<8x128xf32>
    %c5 = arith.constant 5 : index
    %88 = memref.load %arg2[%c5] : memref<20xf32, #tpu.memory_space<smem>>
    %89 = vector.broadcast %88 : f32 to vector<8x128xf32>
    %90 = arith.mulf %89, %1 : vector<8x128xf32>
    %c15 = arith.constant 15 : index
    %91 = memref.load %arg2[%c15] : memref<20xf32, #tpu.memory_space<smem>>
    %92 = vector.broadcast %91 : f32 to vector<8x128xf32>
    %93 = arith.mulf %92, %3 : vector<8x128xf32>
    %94 = arith.addf %90, %93 : vector<8x128xf32>
    %c5_22 = arith.constant 5 : index
    %95 = memref.load %arg3[%c5_22] : memref<10xf32, #tpu.memory_space<smem>>
    %96 = vector.broadcast %95 : f32 to vector<8x128xf32>
    %97 = arith.addf %94, %96 : vector<8x128xf32>
    %cst_23 = arith.constant 0.000000e+00 : f32
    %98 = vector.broadcast %cst_23 : f32 to vector<8x128xf32>
    %99 = arith.maximumf %97, %98 : vector<8x128xf32>
    %c5_24 = arith.constant 5 : index
    %100 = memref.load %arg4[%c5_24] : memref<10xf32, #tpu.memory_space<smem>>
    %101 = vector.broadcast %100 : f32 to vector<8x128xf32>
    %102 = arith.mulf %101, %99 : vector<8x128xf32>
    %103 = arith.addf %87, %102 : vector<8x128xf32>
    %c6 = arith.constant 6 : index
    %104 = memref.load %arg2[%c6] : memref<20xf32, #tpu.memory_space<smem>>
    %105 = vector.broadcast %104 : f32 to vector<8x128xf32>
    %106 = arith.mulf %105, %1 : vector<8x128xf32>
    %c16 = arith.constant 16 : index
    %107 = memref.load %arg2[%c16] : memref<20xf32, #tpu.memory_space<smem>>
    %108 = vector.broadcast %107 : f32 to vector<8x128xf32>
    %109 = arith.mulf %108, %3 : vector<8x128xf32>
    %110 = arith.addf %106, %109 : vector<8x128xf32>
    %c6_25 = arith.constant 6 : index
    %111 = memref.load %arg3[%c6_25] : memref<10xf32, #tpu.memory_space<smem>>
    %112 = vector.broadcast %111 : f32 to vector<8x128xf32>
    %113 = arith.addf %110, %112 : vector<8x128xf32>
    %cst_26 = arith.constant 0.000000e+00 : f32
    %114 = vector.broadcast %cst_26 : f32 to vector<8x128xf32>
    %115 = arith.maximumf %113, %114 : vector<8x128xf32>
    %c6_27 = arith.constant 6 : index
    %116 = memref.load %arg4[%c6_27] : memref<10xf32, #tpu.memory_space<smem>>
    %117 = vector.broadcast %116 : f32 to vector<8x128xf32>
    %118 = arith.mulf %117, %115 : vector<8x128xf32>
    %119 = arith.addf %103, %118 : vector<8x128xf32>
    %c7 = arith.constant 7 : index
    %120 = memref.load %arg2[%c7] : memref<20xf32, #tpu.memory_space<smem>>
    %121 = vector.broadcast %120 : f32 to vector<8x128xf32>
    %122 = arith.mulf %121, %1 : vector<8x128xf32>
    %c17 = arith.constant 17 : index
    %123 = memref.load %arg2[%c17] : memref<20xf32, #tpu.memory_space<smem>>
    %124 = vector.broadcast %123 : f32 to vector<8x128xf32>
    %125 = arith.mulf %124, %3 : vector<8x128xf32>
    %126 = arith.addf %122, %125 : vector<8x128xf32>
    %c7_28 = arith.constant 7 : index
    %127 = memref.load %arg3[%c7_28] : memref<10xf32, #tpu.memory_space<smem>>
    %128 = vector.broadcast %127 : f32 to vector<8x128xf32>
    %129 = arith.addf %126, %128 : vector<8x128xf32>
    %cst_29 = arith.constant 0.000000e+00 : f32
    %130 = vector.broadcast %cst_29 : f32 to vector<8x128xf32>
    %131 = arith.maximumf %129, %130 : vector<8x128xf32>
    %c7_30 = arith.constant 7 : index
    %132 = memref.load %arg4[%c7_30] : memref<10xf32, #tpu.memory_space<smem>>
    %133 = vector.broadcast %132 : f32 to vector<8x128xf32>
    %134 = arith.mulf %133, %131 : vector<8x128xf32>
    %135 = arith.addf %119, %134 : vector<8x128xf32>
    %c8 = arith.constant 8 : index
    %136 = memref.load %arg2[%c8] : memref<20xf32, #tpu.memory_space<smem>>
    %137 = vector.broadcast %136 : f32 to vector<8x128xf32>
    %138 = arith.mulf %137, %1 : vector<8x128xf32>
    %c18 = arith.constant 18 : index
    %139 = memref.load %arg2[%c18] : memref<20xf32, #tpu.memory_space<smem>>
    %140 = vector.broadcast %139 : f32 to vector<8x128xf32>
    %141 = arith.mulf %140, %3 : vector<8x128xf32>
    %142 = arith.addf %138, %141 : vector<8x128xf32>
    %c8_31 = arith.constant 8 : index
    %143 = memref.load %arg3[%c8_31] : memref<10xf32, #tpu.memory_space<smem>>
    %144 = vector.broadcast %143 : f32 to vector<8x128xf32>
    %145 = arith.addf %142, %144 : vector<8x128xf32>
    %cst_32 = arith.constant 0.000000e+00 : f32
    %146 = vector.broadcast %cst_32 : f32 to vector<8x128xf32>
    %147 = arith.maximumf %145, %146 : vector<8x128xf32>
    %c8_33 = arith.constant 8 : index
    %148 = memref.load %arg4[%c8_33] : memref<10xf32, #tpu.memory_space<smem>>
    %149 = vector.broadcast %148 : f32 to vector<8x128xf32>
    %150 = arith.mulf %149, %147 : vector<8x128xf32>
    %151 = arith.addf %135, %150 : vector<8x128xf32>
    %c9 = arith.constant 9 : index
    %152 = memref.load %arg2[%c9] : memref<20xf32, #tpu.memory_space<smem>>
    %153 = vector.broadcast %152 : f32 to vector<8x128xf32>
    %154 = arith.mulf %153, %1 : vector<8x128xf32>
    %c19 = arith.constant 19 : index
    %155 = memref.load %arg2[%c19] : memref<20xf32, #tpu.memory_space<smem>>
    %156 = vector.broadcast %155 : f32 to vector<8x128xf32>
    %157 = arith.mulf %156, %3 : vector<8x128xf32>
    %158 = arith.addf %154, %157 : vector<8x128xf32>
    %c9_34 = arith.constant 9 : index
    %159 = memref.load %arg3[%c9_34] : memref<10xf32, #tpu.memory_space<smem>>
    %160 = vector.broadcast %159 : f32 to vector<8x128xf32>
    %161 = arith.addf %158, %160 : vector<8x128xf32>
    %cst_35 = arith.constant 0.000000e+00 : f32
    %162 = vector.broadcast %cst_35 : f32 to vector<8x128xf32>
    %163 = arith.maximumf %161, %162 : vector<8x128xf32>
    %c9_36 = arith.constant 9 : index
    %164 = memref.load %arg4[%c9_36] : memref<10xf32, #tpu.memory_space<smem>>
    %165 = vector.broadcast %164 : f32 to vector<8x128xf32>
    %166 = arith.mulf %165, %163 : vector<8x128xf32>
    %167 = arith.addf %151, %166 : vector<8x128xf32>
    %c0_37 = arith.constant 0 : index
    %c0_38 = arith.constant 0 : index
    %168 = vector.load %arg6[%c0_37, %c0_38] : memref<8x128xf32, #tpu.memory_space<vmem>>, vector<8x128xf32>
    tpu.vector_store %arg6[%c0_37, %c0_38], %167 {strides = array<i32>} : memref<8x128xf32, #tpu.memory_space<vmem>>, vector<8x128xf32>,
    return
  }
  func.func @transform_0(%arg0: i32) -> (i32, i32, i32) {
    %c0_i32 = arith.constant 0 : i32
    %c0_i32_0 = arith.constant 0 : i32
    %c0_i32_1 = arith.constant 0 : i32
    return %c0_i32, %arg0, %c0_i32_0 : i32, i32, i32
  }
  func.func @transform_1(%arg0: i32) -> i32 {
    %c0_i32 = arith.constant 0 : i32
    %c0_i32_0 = arith.constant 0 : i32
    return %c0_i32 : i32
  }
  func.func @transform_2(%arg0: i32) -> i32 {
    %c0_i32 = arith.constant 0 : i32
    %c0_i32_0 = arith.constant 0 : i32
    return %c0_i32 : i32
  }
  func.func @transform_3(%arg0: i32) -> i32 {
    %c0_i32 = arith.constant 0 : i32
    %c0_i32_0 = arith.constant 0 : i32
    return %c0_i32 : i32
  }
  func.func @transform_4(%arg0: i32) -> i32 {
    %c0_i32 = arith.constant 0 : i32
    %c0_i32_0 = arith.constant 0 : i32
    return %c0_i32 : i32
  }
  func.func @transform_5(%arg0: i32) -> (i32, i32) {
    %c0_i32 = arith.constant 0 : i32
    %c0_i32_0 = arith.constant 0 : i32
    return %arg0, %c0_i32 : i32, i32
  }
}

</mosaic_0001>

<llo_original>
// kernel: tpu_custom_call.1
$region0: #{tpu_custom_call.1}
  #allocation0 [shape = 'u32[]', space=smem, size = 0x4, offset = 0x4, fixed_abs, tag = 'smem constant byte address 0x4 - core index']
  #allocation1 [shape = 'u32[144,128]{1,0:T(1,128)}', space=vmem, size = 0x12000, scoped, tag = 'internal scratch']
  #allocation2 [shape = 'f32[1]{0:T(128)S(6)}', space=smem, size = 0x200, scoped, tag = 'scoped memory for tpu_custom_call.1']
  %s0 = inlined_call_operand.hbm [shape: f32[2,8,128], index: 0, kind: input, shape index: {}]
  %s1 = inlined_call_operand.vmem [shape: f32[20], index: 1, kind: input, shape index: {}]
  %s2 = inlined_call_operand.vmem [shape: f32[10], index: 2, kind: input, shape index: {}]
  %s3 = inlined_call_operand.vmem [shape: f32[10], index: 3, kind: input, shape index: {}]
  %s4 = inlined_call_operand.<no memory space> [shape: f32[1], index: 4, kind: input, shape index: {}]
  %s5 = inlined_call_operand.hbm [shape: f32[8,128], index: 5, kind: output, shape index: {}]
  %s6 = sld [smem:[#allocation0]]
  $region46: #{tpu_custom_call.1} parent=0
    _
  %s8 = ssub.s32 1, %s6
  %s9 = scalar_select 0, %s8, %s6
  %10 = sst [smem:[#allocation2]] %s4
  $region1: #{tpu_custom_call.1} parent=0
    #allocation3 [shape = 'u8[8192]{0}', space=vmem, size = 0x2000, scoped, tag = 'input window, operand 0, single buffered']
    #allocation4 [shape = 's32[1]{0}', space=sflag, size = 0x4, scoped, tag = 'scoped memory for tpu_custom_call.1']
    #allocation5 [shape = 's32[1]{0}', space=sflag, size = 0x4, scoped, tag = 'scoped memory for tpu_custom_call.1']
    #allocation6 [shape = 's32[1]{0}', space=sflag, size = 0x4, scoped, tag = 'scoped memory for tpu_custom_call.1']
    #allocation7 [shape = 'u8[512]{0}', space=smem, size = 0x200, scoped, tag = 'input window, operand 1, single buffered']
    #allocation8 [shape = 'u8[512]{0}', space=smem, size = 0x200, scoped, tag = 'input window, operand 2, single buffered']
    #allocation9 [shape = 's32[1]{0}', space=sflag, size = 0x4, scoped, tag = 'scoped memory for tpu_custom_call.1']
    #allocation10 [shape = 'u8[512]{0}', space=smem, size = 0x200, scoped, tag = 'input window, operand 3, single buffered']
    #allocation11 [shape = 'u8[4096]{0}', space=vmem, size = 0x1000, scoped, tag = 'output window, operand 0, single buffered']
    %11 = vsyncpa [#allocation4], 0
    %12 = vsyncpa [#allocation6], 0
    %13 = vsyncpa [#allocation9], 0
    %14 = vsyncpa [#allocation5], 0
    // Predicated region
    $region2: #{tpu_custom_call.1} parent=1 // pred_check
      _
    $region3: #{tpu_custom_call.1} parent=1 // pred_check_branch
      %16 = sbr.rel (0) target = $region5
    $region4: #{tpu_custom_call.1} parent=1 // pred_region
      %s18 = ssub.s32 256, 256
      %19 = vsyncadd [#allocation4], %s18
      %s20 = sshll.u32 [#allocation3], 4
      %s21 = int_to_ptr.vmem [resolvable:$true] %s20
      %26 = dma.hbm_to_vmem [thread:$0]  %s0, 256, %s21, [#allocation4], 128, 128, 8
    $region5: #{tpu_custom_call.1} parent=1 // pred_fallthru
      _
    // Predicated region
    $region6: #{tpu_custom_call.1} parent=1 // pred_check
      _
    $region7: #{tpu_custom_call.1} parent=1 // pred_check_branch
      %28 = sbr.rel (0) target = $region9
    $region8: #{tpu_custom_call.1} parent=1 // pred_region
      %s30 = ssub.s32 16, 16
      %31 = vsyncadd [#allocation6], %s30
      %s33 = sshll.u32 %s1, 4
      %s34 = int_to_ptr.vmem [resolvable:$true] %s33
      %36 = dma.vmem_to_smem %s34, 16, [#allocation7], [#allocation6]
    $region9: #{tpu_custom_call.1} parent=1 // pred_fallthru
      _
    // Predicated region
    $region10: #{tpu_custom_call.1} parent=1 // pred_check
      _
    $region11: #{tpu_custom_call.1} parent=1 // pred_check_branch
      %38 = sbr.rel (0) target = $region13
    $region12: #{tpu_custom_call.1} parent=1 // pred_region
      %s40 = ssub.s32 16, 16
      %41 = vsyncadd [#allocation9], %s40
      %s43 = sshll.u32 %s2, 4
      %s44 = int_to_ptr.vmem [resolvable:$true] %s43
      %46 = dma.vmem_to_smem %s44, 16, [#allocation8], [#allocation9]
    $region13: #{tpu_custom_call.1} parent=1 // pred_fallthru
      _
    // Predicated region
    $region14: #{tpu_custom_call.1} parent=1 // pred_check
      _
    $region15: #{tpu_custom_call.1} parent=1 // pred_check_branch
      %48 = sbr.rel (0) target = $region17
    $region16: #{tpu_custom_call.1} parent=1 // pred_region
      %s50 = ssub.s32 16, 16
      %51 = vsyncadd [#allocation9], %s50
      %s53 = sshll.u32 %s3, 4
      %s54 = int_to_ptr.vmem [resolvable:$true] %s53
      %56 = dma.vmem_to_smem %s54, 16, [#allocation10], [#allocation9]
    $region17: #{tpu_custom_call.1} parent=1 // pred_fallthru
      _
    // Predicated region
    $region18: #{tpu_custom_call.1} parent=1 // pred_check
      _
    $region19: #{tpu_custom_call.1} parent=1 // pred_check_branch
      %58 = sbr.rel (0) target = $region21
    $region20: #{tpu_custom_call.1} parent=1 // pred_region
      _
    $region21: #{tpu_custom_call.1} parent=1 // pred_fallthru
      _
    // Predicated region
    $region22: #{tpu_custom_call.1} parent=1 // pred_check
      _
    $region23: #{tpu_custom_call.1} parent=1 // pred_check_branch
      %60 = sbr.rel (0) target = $region25
    $region24: #{tpu_custom_call.1} parent=1 // pred_region
      %61 = dma.done [#allocation4], 256
    $region25: #{tpu_custom_call.1} parent=1 // pred_fallthru
      _
    // Predicated region
    $region26: #{tpu_custom_call.1} parent=1 // pred_check
      _
    $region27: #{tpu_custom_call.1} parent=1 // pred_check_branch
      %63 = sbr.rel (0) target = $region29
    $region28: #{tpu_custom_call.1} parent=1 // pred_region
      %64 = dma.done [#allocation6], 16
    $region29: #{tpu_custom_call.1} parent=1 // pred_fallthru
      _
    // Predicated region
    $region30: #{tpu_custom_call.1} parent=1 // pred_check
      _
    $region31: #{tpu_custom_call.1} parent=1 // pred_check_branch
      %66 = sbr.rel (0) target = $region33
    $region32: #{tpu_custom_call.1} parent=1 // pred_region
      %67 = dma.done [#allocation9], 16
    $region33: #{tpu_custom_call.1} parent=1 // pred_fallthru
      _
    // Predicated region
    $region34: #{tpu_custom_call.1} parent=1 // pred_check
      _
    $region35: #{tpu_custom_call.1} parent=1 // pred_check_branch
      %69 = sbr.rel (0) target = $region37
    $region36: #{tpu_custom_call.1} parent=1 // pred_region
      %70 = dma.done [#allocation9], 16
    $region37: #{tpu_custom_call.1} parent=1 // pred_fallthru
      _
    %71 = sfence
    %v72 = vld [vmem:[#allocation3] sm:$0xff]
    %s73 = scalar_lea.vmem [#allocation3], 8
    %v74 = vld [vmem:[%s73] sm:$0xff]
    %s75 = sld [smem:[#allocation2]]
    %v76 = vstv %s75
    %v77 = vadd.f32 %v76, 0.0
    %s78 = sld [smem:[#allocation7]]
    %v79 = vstv %s78
    %v80 = vmul.f32 %v79, %v72
    %s81 = sld [smem:[#allocation7 + $0xa]]
    %v82 = vstv %s81
    %v83 = vmul.f32 %v82, %v74
    %v84 = vadd.f32 %v80, %v83
    %s85 = sld [smem:[#allocation8]]
    %v86 = vstv %s85
    %v87 = vadd.f32 %v84, %v86
    %v88 = vmax.f32 %v87, 0.0
    %s89 = sld [smem:[#allocation10]]
    %v90 = vstv %s89
    %v91 = vmul.f32 %v90, %v88
    %v92 = vadd.f32 %v77, %v91
    %s93 = sld [smem:[#allocation7 + $0x1]]
    %v94 = vstv %s93
    %v95 = vmul.f32 %v94, %v72
    %s96 = sld [smem:[#allocation7 + $0xb]]
    %v97 = vstv %s96
    %v98 = vmul.f32 %v97, %v74
    %v99 = vadd.f32 %v95, %v98
    %s100 = sld [smem:[#allocation8 + $0x1]]
    %v101 = vstv %s100
    %v102 = vadd.f32 %v99, %v101
    %v103 = vmax.f32 %v102, 0.0
    %s104 = sld [smem:[#allocation10 + $0x1]]
    %v105 = vstv %s104
    %v106 = vmul.f32 %v105, %v103
    %v107 = vadd.f32 %v92, %v106
    %s108 = sld [smem:[#allocation7 + $0x2]]
    %v109 = vstv %s108
    %v110 = vmul.f32 %v109, %v72
    %s111 = sld [smem:[#allocation7 + $0xc]]
    %v112 = vstv %s111
    %v113 = vmul.f32 %v112, %v74
    %v114 = vadd.f32 %v110, %v113
    %s115 = sld [smem:[#allocation8 + $0x2]]
    %v116 = vstv %s115
    %v117 = vadd.f32 %v114, %v116
    %v118 = vmax.f32 %v117, 0.0
    %s119 = sld [smem:[#allocation10 + $0x2]]
    %v120 = vstv %s119
    %v121 = vmul.f32 %v120, %v118
    %v122 = vadd.f32 %v107, %v121
    %s123 = sld [smem:[#allocation7 + $0x3]]
    %v124 = vstv %s123
    %v125 = vmul.f32 %v124, %v72
    %s126 = sld [smem:[#allocation7 + $0xd]]
    %v127 = vstv %s126
    %v128 = vmul.f32 %v127, %v74
    %v129 = vadd.f32 %v125, %v128
    %s130 = sld [smem:[#allocation8 + $0x3]]
    %v131 = vstv %s130
    %v132 = vadd.f32 %v129, %v131
    %v133 = vmax.f32 %v132, 0.0
    %s134 = sld [smem:[#allocation10 + $0x3]]
    %v135 = vstv %s134
    %v136 = vmul.f32 %v135, %v133
    %v137 = vadd.f32 %v122, %v136
    %s138 = sld [smem:[#allocation7 + $0x4]]
    %v139 = vstv %s138
    %v140 = vmul.f32 %v139, %v72
    %s141 = sld [smem:[#allocation7 + $0xe]]
    %v142 = vstv %s141
    %v143 = vmul.f32 %v142, %v74
    %v144 = vadd.f32 %v140, %v143
    %s145 = sld [smem:[#allocation8 + $0x4]]
    %v146 = vstv %s145
    %v147 = vadd.f32 %v144, %v146
    %v148 = vmax.f32 %v147, 0.0
    %s149 = sld [smem:[#allocation10 + $0x4]]
    %v150 = vstv %s149
    %v151 = vmul.f32 %v150, %v148
    %v152 = vadd.f32 %v137, %v151
    %s153 = sld [smem:[#allocation7 + $0x5]]
    %v154 = vstv %s153
    %v155 = vmul.f32 %v154, %v72
    %s156 = sld [smem:[#allocation7 + $0xf]]
    %v157 = vstv %s156
    %v158 = vmul.f32 %v157, %v74
    %v159 = vadd.f32 %v155, %v158
    %s160 = sld [smem:[#allocation8 + $0x5]]
    %v161 = vstv %s160
    %v162 = vadd.f32 %v159, %v161
    %v163 = vmax.f32 %v162, 0.0
    %s164 = sld [smem:[#allocation10 + $0x5]]
    %v165 = vstv %s164
    %v166 = vmul.f32 %v165, %v163
    %v167 = vadd.f32 %v152, %v166
    %s168 = sld [smem:[#allocation7 + $0x6]]
    %v169 = vstv %s168
    %v170 = vmul.f32 %v169, %v72
    %s171 = sld [smem:[#allocation7 + $0x10]]
    %v172 = vstv %s171
    %v173 = vmul.f32 %v172, %v74
    %v174 = vadd.f32 %v170, %v173
    %s175 = sld [smem:[#allocation8 + $0x6]]
    %v176 = vstv %s175
    %v177 = vadd.f32 %v174, %v176
    %v178 = vmax.f32 %v177, 0.0
    %s179 = sld [smem:[#allocation10 + $0x6]]
    %v180 = vstv %s179
    %v181 = vmul.f32 %v180, %v178
    %v182 = vadd.f32 %v167, %v181
    %s183 = sld [smem:[#allocation7 + $0x7]]
    %v184 = vstv %s183
    %v185 = vmul.f32 %v184, %v72
    %s186 = sld [smem:[#allocation7 + $0x11]]
    %v187 = vstv %s186
    %v188 = vmul.f32 %v187, %v74
    %v189 = vadd.f32 %v185, %v188
    %s190 = sld [smem:[#allocation8 + $0x7]]
    %v191 = vstv %s190
    %v192 = vadd.f32 %v189, %v191
    %v193 = vmax.f32 %v192, 0.0
    %s194 = sld [smem:[#allocation10 + $0x7]]
    %v195 = vstv %s194
    %v196 = vmul.f32 %v195, %v193
    %v197 = vadd.f32 %v182, %v196
    %s198 = sld [smem:[#allocation7 + $0x8]]
    %v199 = vstv %s198
    %v200 = vmul.f32 %v199, %v72
    %s201 = sld [smem:[#allocation7 + $0x12]]
    %v202 = vstv %s201
    %v203 = vmul.f32 %v202, %v74
    %v204 = vadd.f32 %v200, %v203
    %s205 = sld [smem:[#allocation8 + $0x8]]
    %v206 = vstv %s205
    %v207 = vadd.f32 %v204, %v206
    %v208 = vmax.f32 %v207, 0.0
    %s209 = sld [smem:[#allocation10 + $0x8]]
    %v210 = vstv %s209
    %v211 = vmul.f32 %v210, %v208
    %v212 = vadd.f32 %v197, %v211
    %s213 = sld [smem:[#allocation7 + $0x9]]
    %v214 = vstv %s213
    %v215 = vmul.f32 %v214, %v72
    %s216 = sld [smem:[#allocation7 + $0x13]]
    %v217 = vstv %s216
    %v218 = vmul.f32 %v217, %v74
    %v219 = vadd.f32 %v215, %v218
    %s220 = sld [smem:[#allocation8 + $0x9]]
    %v221 = vstv %s220
    %v222 = vadd.f32 %v219, %v221
    %v223 = vmax.f32 %v222, 0.0
    %s224 = sld [smem:[#allocation10 + $0x9]]
    %v225 = vstv %s224
    %v226 = vmul.f32 %v225, %v223
    %v227 = vadd.f32 %v212, %v226
    %228 = vst [vmem:[#allocation11] sm:$0xff] %v227
    // Predicated region
    $region38: #{tpu_custom_call.1} parent=1 // pred_check
      _
    $region39: #{tpu_custom_call.1} parent=1 // pred_check_branch
      %230 = sbr.rel (0) target = $region41
    $region40: #{tpu_custom_call.1} parent=1 // pred_region
      %s232 = ssub.s32 128, 128
      %233 = vsyncadd [#allocation5], %s232
      %s235 = sshll.u32 [#allocation11], 4
      %s236 = int_to_ptr.vmem [resolvable:$true] %s235
      %238 = dma.vmem_to_hbm [thread:$0]  %s236, 128, %s5, [#allocation5]
    $region41: #{tpu_custom_call.1} parent=1 // pred_fallthru
      _
    // Predicated region
    $region42: #{tpu_custom_call.1} parent=1 // pred_check
      _
    $region43: #{tpu_custom_call.1} parent=1 // pred_check_branch
      %240 = sbr.rel (0) target = $region45
    $region44: #{tpu_custom_call.1} parent=1 // pred_region
      %241 = dma.done [#allocation5], 128
    $region45: #{tpu_custom_call.1} parent=1 // pred_fallthru
      _
    %242 = vsyncpa [#allocation4], 1
    %243 = vsyncpa [#allocation5], 1
    %244 = vsyncpa [#allocation6], 1
    %245 = vsyncpa [#allocation9], 1

</llo_original>
